<compile_context>
chip_gen: v5e
topology: v5e:2x2
jax: 0.10.0
libtpu: 0.0.40
codegen_flags: <defaults>
</compile_context>

<pallas_src>
import jax
import jax.numpy as jnp
from jax.experimental import pallas as pl
from jax.experimental.pallas import tpu as pltpu

LANE = 128           # pad hidden feature dims to the 128-lane vreg width
BATCH_TILE = 1024    # max batch rows streamed per grid step


def _round_up(n, m):
    return ((n + m - 1) // m) * m


def dqn_kernel(x_ref, w1_ref, b1_ref, w2_ref, b2_ref, w3_ref, b3_ref, out_ref):
    # x streamed as f32 with its true (small) feature dim; cast to bf16 only
    # where it feeds the MXU. Accumulation + epilogue stay in f32.
    x = x_ref[...].astype(jnp.bfloat16)
    # fc1 + relu
    h1 = jnp.dot(x, w1_ref[...], preferred_element_type=jnp.float32)
    h1 = jnp.maximum(h1 + b1_ref[...], 0.0)
    # fc2 + relu
    h2 = jnp.dot(h1.astype(jnp.bfloat16), w2_ref[...],
                 preferred_element_type=jnp.float32)
    h2 = jnp.maximum(h2 + b2_ref[...], 0.0)
    # fc3 (raw action values, no activation) -> narrow (tb, n_actions) store
    out = jnp.dot(h2.astype(jnp.bfloat16), w3_ref[...],
                  preferred_element_type=jnp.float32)
    out_ref[...] = (out + b3_ref[...]).astype(out_ref.dtype)


def prepare_params(params):
    """One-time pad/cast of weights & biases (call once, reuse every step).

    Weights are stored [in_features, out_features] (y = x @ W + b).
    Hidden dims are zero-padded to 128 lanes; padding is exact (padded cols
    get zero weights + zero bias, stay zero through ReLU, and hit zero rows of
    the next layer). Input dim and n_actions are left unpadded.
    """
    w1, b1, w2, b2, w3, b3 = (params[k] for k in ("w1", "b1", "w2", "b2", "w3", "b3"))
    in_dims = w1.shape[0]
    d_h1 = _round_up(w1.shape[1], LANE)
    d_h2 = _round_up(w2.shape[1], LANE)
    n_actions = w3.shape[1]

    def pad2(a, rows, cols, dtype):
        out = jnp.zeros((rows, cols), dtype)
        return out.at[: a.shape[0], : a.shape[1]].set(a.astype(dtype))

    return {
        "w1": pad2(w1, in_dims, d_h1, jnp.bfloat16),
        "b1": pad2(b1.reshape(1, -1), 1, d_h1, jnp.float32),
        "w2": pad2(w2, d_h1, d_h2, jnp.bfloat16),
        "b2": pad2(b2.reshape(1, -1), 1, d_h2, jnp.float32),
        "w3": pad2(w3, d_h2, n_actions, jnp.bfloat16),
        "b3": b3.reshape(1, n_actions).astype(jnp.float32),
    }


def dqn_forward(x, prepared, *, batch_tile=BATCH_TILE):
    """x: [B, input_dims] float32; prepared: output of prepare_params()."""
    w1, b1, w2, b2, w3, b3 = (prepared[k] for k in ("w1", "b1", "w2", "b2", "w3", "b3"))
    B, in_dims = x.shape
    assert in_dims == w1.shape[0]
    n_actions = w3.shape[1]

    # Batch tile: multiple of 16 (bf16 sublane packing of downstream MXU feeds),
    # capped at batch_tile, sized so moderate/large B gives >= 2 grid steps
    # (lets the "parallel" axis shard across v7x's 2 TensorCores).
    tb = min(batch_tile, max(16, _round_up(-(-B // 2), 16)))
    b_pad = _round_up(B, tb)
    grid = (b_pad // tb,)

    # Only the batch dim is padded (feature dim passes through untouched).
    x_p = x if b_pad == B else jnp.pad(x, ((0, b_pad - B), (0, 0)))

    # Weights / biases: full-array blocks with constant index_map so they are
    # DMA'd into VMEM once and stay resident across all batch tiles.
    def const(a):
        return pl.BlockSpec(a.shape, lambda i: (0, 0),
                            memory_space=pltpu.MemorySpace.VMEM)

    out_p = pl.pallas_call(
        dqn_kernel,
        out_shape=jax.ShapeDtypeStruct((b_pad, n_actions), jnp.float32),
        grid=grid,
        in_specs=[
            pl.BlockSpec((tb, in_dims), lambda i: (i, 0)),   # x: streamed per tile
            const(w1), const(b1),
            const(w2), const(b2),
            const(w3), const(b3),
        ],
        out_specs=pl.BlockSpec((tb, n_actions), lambda i: (i, 0)),
        compiler_params=pltpu.CompilerParams(
            dimension_semantics=("parallel",)),  # shard batch tiles across TCs (v7x)
    )(x_p, w1, b1, w2, b2, w3, b3)

    return out_p[:B]


def init_params(key, input_dims, fc1_dims, fc2_dims, n_actions):
    """Deterministic init mimicking nn.Linear default (uniform +-1/sqrt(fan_in))."""
    ks = jax.random.split(key, 6)

    def linear(kw, kb, fan_in, fan_out):
        bound = 1.0 / jnp.sqrt(jnp.float32(fan_in))
        w = jax.random.uniform(kw, (fan_in, fan_out), jnp.float32, -bound, bound)
        b = jax.random.uniform(kb, (1, fan_out), jnp.float32, -bound, bound)
        return w, b

    w1, b1 = linear(ks[0], ks[1], input_dims, fc1_dims)
    w2, b2 = linear(ks[2], ks[3], fc1_dims, fc2_dims)
    w3, b3 = linear(ks[4], ks[5], fc2_dims, n_actions)
    return {"w1": w1, "b1": b1, "w2": w2, "b2": b2, "w3": w3, "b3": b3}


def ref_forward_bf16(x, params):
    """Pure-JAX reference with the same bf16-operand / f32-accumulate numerics."""
    bf = jnp.bfloat16
    h1 = jnp.dot(x.astype(bf), params["w1"].astype(bf),
                 preferred_element_type=jnp.float32) + params["b1"]
    h1 = jnp.maximum(h1, 0.0)
    h2 = jnp.dot(h1.astype(bf), params["w2"].astype(bf),
                 preferred_element_type=jnp.float32) + params["b2"]
    h2 = jnp.maximum(h2, 0.0)
    return jnp.dot(h2.astype(bf), params["w3"].astype(bf),
                   preferred_element_type=jnp.float32) + params["b3"]


if __name__ == "__main__":
    # LunarLander-v2: observation dim 8, 4 actions. Small hidden dims for test.
    B, IN_DIMS, FC1, FC2, N_ACTIONS = 8, 8, 32, 32, 4

    key = jax.random.PRNGKey(0)
    k_params, k_x = jax.random.split(key)
    params = init_params(k_params, IN_DIMS, FC1, FC2, N_ACTIONS)
    x = jax.random.normal(k_x, (B, IN_DIMS), dtype=jnp.float32)

    # Pad/cast params once (outside the hot path); hot path is one pallas_call.
    prepared = prepare_params(params)
    fwd = jax.jit(lambda xs: dqn_forward(xs, prepared))

    actions = fwd(x)
    jax.block_until_ready(actions)
    assert actions.shape == (B, N_ACTIONS)

    # Match against a reference with identical bf16 matmul numerics (tight tol)
    ref_bf16 = ref_forward_bf16(x, params)
    assert jnp.allclose(actions, ref_bf16, atol=2e-3, rtol=2e-3)

    # And against the pure-f32 forward (loose tol for documented bf16 rounding)
    h1 = jnp.maximum(x @ params["w1"] + params["b1"], 0.0)
    h2 = jnp.maximum(h1 @ params["w2"] + params["b2"], 0.0)
    ref_f32 = h2 @ params["w3"] + params["b3"]
    assert jnp.allclose(actions, ref_f32, atol=5e-2, rtol=5e-2)

    print("KERNEL_OK")
</pallas_src>

<mosaic_0001>
module attributes {stable_mosaic.version = 11 : i64} {
  func.func @dqn_kernel(%arg0: i32, %arg1: memref<16x8xf32, #tpu.memory_space<vmem>>, %arg2: memref<8x128xbf16, #tpu.memory_space<vmem>>, %arg3: memref<1x128xf32, #tpu.memory_space<vmem>>, %arg4: memref<128x128xbf16, #tpu.memory_space<vmem>>, %arg5: memref<1x128xf32, #tpu.memory_space<vmem>>, %arg6: memref<128x4xbf16, #tpu.memory_space<vmem>>, %arg7: memref<1x4xf32, #tpu.memory_space<vmem>>, %arg8: memref<16x4xf32, #tpu.memory_space<vmem>>) attributes {dimension_semantics = [#tpu.dimension_semantics<parallel>], iteration_bounds = array<i64: 1>, scalar_prefetch = 0 : i64, scratch_operands = 0 : i64, tpu.core_type = #tpu.core_type<tc>, window_params = [{transform_indices = @transform_0, window_bounds = array<i64: 16, 8>}, {pipeline_mode = #tpu.pipeline_mode<synchronous>, transform_indices = @transform_1, window_bounds = array<i64: 8, 128>}, {pipeline_mode = #tpu.pipeline_mode<synchronous>, transform_indices = @transform_2, window_bounds = array<i64: 1, 128>}, {pipeline_mode = #tpu.pipeline_mode<synchronous>, transform_indices = @transform_3, window_bounds = array<i64: 128, 128>}, {pipeline_mode = #tpu.pipeline_mode<synchronous>, transform_indices = @transform_4, window_bounds = array<i64: 1, 128>}, {pipeline_mode = #tpu.pipeline_mode<synchronous>, transform_indices = @transform_5, window_bounds = array<i64: 128, 4>}, {pipeline_mode = #tpu.pipeline_mode<synchronous>, transform_indices = @transform_6, window_bounds = array<i64: 1, 4>}, {transform_indices = @transform_7, window_bounds = array<i64: 16, 4>}]} {
    %c0 = arith.constant 0 : index
    %c0_0 = arith.constant 0 : index
    %0 = vector.load %arg1[%c0, %c0_0] : memref<16x8xf32, #tpu.memory_space<vmem>>, vector<16x8xf32>
    %1 = arith.truncf %0 : vector<16x8xf32> to vector<16x8xbf16>
    %c0_1 = arith.constant 0 : index
    %c0_2 = arith.constant 0 : index
    %2 = vector.load %arg2[%c0_1, %c0_2] : memref<8x128xbf16, #tpu.memory_space<vmem>>, vector<8x128xbf16>
    %cst = arith.constant dense<0.000000e+00> : vector<16x128xf32>
    %3 = tpu.matmul %1, %2, %cst {dimension_numbers = #tpu.dot_dimension_numbers<[1], [0], [0], [1], [0, 0, 1, 1], [], []>} : vector<16x8xbf16>, vector<8x128xbf16>, vector<16x128xf32> -> vector<16x128xf32>
    %c0_3 = arith.constant 0 : index
    %c0_4 = arith.constant 0 : index
    %4 = vector.load %arg3[%c0_3, %c0_4] : memref<1x128xf32, #tpu.memory_space<vmem>>, vector<1x128xf32>
    %5 = vector.broadcast %4 : vector<1x128xf32> to vector<16x128xf32>
    %6 = arith.addf %3, %5 : vector<16x128xf32>
    %cst_5 = arith.constant 0.000000e+00 : f32
    %7 = vector.broadcast %cst_5 : f32 to vector<16x128xf32>
    %8 = arith.maximumf %6, %7 : vector<16x128xf32>
    %9 = arith.truncf %8 : vector<16x128xf32> to vector<16x128xbf16>
    %c0_6 = arith.constant 0 : index
    %c0_7 = arith.constant 0 : index
    %10 = vector.load %arg4[%c0_6, %c0_7] : memref<128x128xbf16, #tpu.memory_space<vmem>>, vector<128x128xbf16>
    %cst_8 = arith.constant dense<0.000000e+00> : vector<16x128xf32>
    %11 = tpu.matmul %9, %10, %cst_8 {dimension_numbers = #tpu.dot_dimension_numbers<[1], [0], [0], [1], [0, 0, 1, 1], [], []>} : vector<16x128xbf16>, vector<128x128xbf16>, vector<16x128xf32> -> vector<16x128xf32>
    %c0_9 = arith.constant 0 : index
    %c0_10 = arith.constant 0 : index
    %12 = vector.load %arg5[%c0_9, %c0_10] : memref<1x128xf32, #tpu.memory_space<vmem>>, vector<1x128xf32>
    %13 = vector.broadcast %12 : vector<1x128xf32> to vector<16x128xf32>
    %14 = arith.addf %11, %13 : vector<16x128xf32>
    %cst_11 = arith.constant 0.000000e+00 : f32
    %15 = vector.broadcast %cst_11 : f32 to vector<16x128xf32>
    %16 = arith.maximumf %14, %15 : vector<16x128xf32>
    %17 = arith.truncf %16 : vector<16x128xf32> to vector<16x128xbf16>
    %c0_12 = arith.constant 0 : index
    %c0_13 = arith.constant 0 : index
    %18 = vector.load %arg6[%c0_12, %c0_13] : memref<128x4xbf16, #tpu.memory_space<vmem>>, vector<128x4xbf16>
    %cst_14 = arith.constant dense<0.000000e+00> : vector<16x4xf32>
    %19 = tpu.matmul %17, %18, %cst_14 {dimension_numbers = #tpu.dot_dimension_numbers<[1], [0], [0], [1], [0, 0, 1, 1], [], []>} : vector<16x128xbf16>, vector<128x4xbf16>, vector<16x4xf32> -> vector<16x4xf32>
    %c0_15 = arith.constant 0 : index
    %c0_16 = arith.constant 0 : index
    %20 = vector.load %arg7[%c0_15, %c0_16] : memref<1x4xf32, #tpu.memory_space<vmem>>, vector<1x4xf32>
    %21 = vector.broadcast %20 : vector<1x4xf32> to vector<16x4xf32>
    %22 = arith.addf %19, %21 : vector<16x4xf32>
    %c0_17 = arith.constant 0 : index
    %c0_18 = arith.constant 0 : index
    %23 = vector.load %arg8[%c0_17, %c0_18] : memref<16x4xf32, #tpu.memory_space<vmem>>, vector<16x4xf32>
    tpu.vector_store %arg8[%c0_17, %c0_18], %22 {strides = array<i32>} : memref<16x4xf32, #tpu.memory_space<vmem>>, vector<16x4xf32>,
    return
  }
  func.func @transform_0(%arg0: i32) -> (i32, i32) {
    %c0_i32 = arith.constant 0 : i32
    %c0_i32_0 = arith.constant 0 : i32
    return %arg0, %c0_i32 : i32, i32
  }
  func.func @transform_1(%arg0: i32) -> (i32, i32) {
    %c0_i32 = arith.constant 0 : i32
    %c0_i32_0 = arith.constant 0 : i32
    %c0_i32_1 = arith.constant 0 : i32
    return %c0_i32, %c0_i32_0 : i32, i32
  }
  func.func @transform_2(%arg0: i32) -> (i32, i32) {
    %c0_i32 = arith.constant 0 : i32
    %c0_i32_0 = arith.constant 0 : i32
    %c0_i32_1 = arith.constant 0 : i32
    return %c0_i32, %c0_i32_0 : i32, i32
  }
  func.func @transform_3(%arg0: i32) -> (i32, i32) {
    %c0_i32 = arith.constant 0 : i32
    %c0_i32_0 = arith.constant 0 : i32
    %c0_i32_1 = arith.constant 0 : i32
    return %c0_i32, %c0_i32_0 : i32, i32
  }
  func.func @transform_4(%arg0: i32) -> (i32, i32) {
    %c0_i32 = arith.constant 0 : i32
    %c0_i32_0 = arith.constant 0 : i32
    %c0_i32_1 = arith.constant 0 : i32
    return %c0_i32, %c0_i32_0 : i32, i32
  }
  func.func @transform_5(%arg0: i32) -> (i32, i32) {
    %c0_i32 = arith.constant 0 : i32
    %c0_i32_0 = arith.constant 0 : i32
    %c0_i32_1 = arith.constant 0 : i32
    return %c0_i32, %c0_i32_0 : i32, i32
  }
  func.func @transform_6(%arg0: i32) -> (i32, i32) {
    %c0_i32 = arith.constant 0 : i32
    %c0_i32_0 = arith.constant 0 : i32
    %c0_i32_1 = arith.constant 0 : i32
    return %c0_i32, %c0_i32_0 : i32, i32
  }
  func.func @transform_7(%arg0: i32) -> (i32, i32) {
    %c0_i32 = arith.constant 0 : i32
    %c0_i32_0 = arith.constant 0 : i32
    return %arg0, %c0_i32 : i32, i32
  }
}

</mosaic_0001>

<llo_original>
// kernel: _lambda_.1
$region0: #{_lambda_.1}
  #allocation0 [shape = 'u32[]', space=smem, size = 0x4, offset = 0x4, fixed_abs, tag = 'smem constant byte address 0x4 - core index']
  #allocation1 [shape = 'u32[72,128]{1,0:T(1,128)}', space=vmem, size = 0x9000, scoped, tag = 'internal scratch']
  %s0 = inlined_call_operand.vmem [shape: f32[16,8], index: 0, kind: input, shape index: {}]
  %s1 = inlined_call_operand.vmem [shape: bf16[8,128], index: 1, kind: input, shape index: {}]
  %s2 = inlined_call_operand.vmem [shape: f32[1,128], index: 2, kind: input, shape index: {}]
  %s3 = inlined_call_operand.hbm [shape: bf16[128,128], index: 3, kind: input, shape index: {}]
  %s4 = inlined_call_operand.vmem [shape: f32[1,128], index: 4, kind: input, shape index: {}]
  %s5 = inlined_call_operand.hbm [shape: bf16[128,4], index: 5, kind: input, shape index: {}]
  %s6 = inlined_call_operand.vmem [shape: f32[1,4], index: 6, kind: input, shape index: {}]
  %s7 = inlined_call_operand.vmem [shape: f32[16,4], index: 7, kind: output, shape index: {}]
  %s8 = sld [smem:[#allocation0]]
  $region46: #{_lambda_.1} parent=0
    _
  %s10 = ssub.s32 1, %s8
  %s11 = scalar_select 0, %s10, %s8
  $region1: #{_lambda_.1} parent=0
    #allocation2 [shape = 'u8[32768]{0}', space=vmem, size = 0x8000, scoped, tag = 'input window, operand 3, single buffered']
    #allocation3 [shape = 's32[1]{0}', space=sflag, size = 0x4, scoped, tag = 'scoped memory for _lambda_.1']
    #allocation4 [shape = 'u8[32768]{0}', space=vmem, size = 0x8000, scoped, tag = 'input window, operand 5, single buffered']
    #allocation5 [shape = 's32[1]{0}', space=sflag, size = 0x4, scoped, tag = 'scoped memory for _lambda_.1']
    %12 = vsyncpa [#allocation3], 0
    %13 = vsyncpa [#allocation5], 0
    // Predicated region
    $region2: #{_lambda_.1} parent=1 // pred_check
      _
    $region3: #{_lambda_.1} parent=1 // pred_check_branch
      %15 = sbr.rel (0) target = $region5
    $region4: #{_lambda_.1} parent=1 // pred_region
      _
    $region5: #{_lambda_.1} parent=1 // pred_fallthru
      _
    // Predicated region
    $region6: #{_lambda_.1} parent=1 // pred_check
      _
    $region7: #{_lambda_.1} parent=1 // pred_check_branch
      %17 = sbr.rel (0) target = $region9
    $region8: #{_lambda_.1} parent=1 // pred_region
      _
    $region9: #{_lambda_.1} parent=1 // pred_fallthru
      _
    // Predicated region
    $region10: #{_lambda_.1} parent=1 // pred_check
      _
    $region11: #{_lambda_.1} parent=1 // pred_check_branch
      %19 = sbr.rel (0) target = $region13
    $region12: #{_lambda_.1} parent=1 // pred_region
      _
    $region13: #{_lambda_.1} parent=1 // pred_fallthru
      _
    // Predicated region
    $region14: #{_lambda_.1} parent=1 // pred_check
      _
    $region15: #{_lambda_.1} parent=1 // pred_check_branch
      %21 = sbr.rel (0) target = $region17
    $region16: #{_lambda_.1} parent=1 // pred_region
      %23 = vsyncadd [#allocation3], 0
      %s24 = sshll.u32 %s3, 4
      %s25 = int_to_ptr.hbm [resolvable:$true] %s24
      %s26 = sshll.u32 [#allocation2], 4
      %s27 = int_to_ptr.vmem [resolvable:$true] %s26
      %32 = dma.hbm_to_vmem [thread:$0]  %s25, 1024, %s27, [#allocation3], 64, 64, 4
    $region17: #{_lambda_.1} parent=1 // pred_fallthru
      _
    // Predicated region
    $region18: #{_lambda_.1} parent=1 // pred_check
      _
    $region19: #{_lambda_.1} parent=1 // pred_check_branch
      %34 = sbr.rel (0) target = $region21
    $region20: #{_lambda_.1} parent=1 // pred_region
      _
    $region21: #{_lambda_.1} parent=1 // pred_fallthru
      _
    // Predicated region
    $region22: #{_lambda_.1} parent=1 // pred_check
      _
    $region23: #{_lambda_.1} parent=1 // pred_check_branch
      %36 = sbr.rel (0) target = $region25
    $region24: #{_lambda_.1} parent=1 // pred_region
      %38 = vsyncadd [#allocation5], 0
      %s39 = sshll.u32 %s5, 4
      %s40 = int_to_ptr.hbm [resolvable:$true] %s39
      %s41 = sshll.u32 [#allocation4], 4
      %s42 = int_to_ptr.vmem [resolvable:$true] %s41
      %47 = dma.hbm_to_vmem [thread:$0]  %s40, 1024, %s42, [#allocation5], 64, 64, 4
    $region25: #{_lambda_.1} parent=1 // pred_fallthru
      _
    // Predicated region
    $region26: #{_lambda_.1} parent=1 // pred_check
      _
    $region27: #{_lambda_.1} parent=1 // pred_check_branch
      %49 = sbr.rel (0) target = $region29
    $region28: #{_lambda_.1} parent=1 // pred_region
      _
    $region29: #{_lambda_.1} parent=1 // pred_fallthru
      _
    // Predicated region
    $region30: #{_lambda_.1} parent=1 // pred_check
      _
    $region31: #{_lambda_.1} parent=1 // pred_check_branch
      %51 = sbr.rel (0) target = $region33
    $region32: #{_lambda_.1} parent=1 // pred_region
      %53 = dma.done [#allocation3], 1024
    $region33: #{_lambda_.1} parent=1 // pred_fallthru
      _
    // Predicated region
    $region34: #{_lambda_.1} parent=1 // pred_check
      _
    $region35: #{_lambda_.1} parent=1 // pred_check_branch
      %55 = sbr.rel (0) target = $region37
    $region36: #{_lambda_.1} parent=1 // pred_region
      %57 = dma.done [#allocation5], 1024
    $region37: #{_lambda_.1} parent=1 // pred_fallthru
      _
    %v59 = vld [vmem:[%s0] sm:$0xff]
    %v60 = vld [vmem:[%s0 + $0x8] sm:$0xff]
    %v61 = vpack.c.bf16 %v60, %v59
    %v62 = vld [vmem:[%s1] sm:$0xf]
    %v63 = vld [vmem:[%s2] sm:$0x1]
    %v65 = vperm.slane %v63, 0
    %vm67 = vcmask 64512
    %v69 = vsel %vm67, %v61, 0
    %vm71 = vcmask 1043456
    %v73 = vsel %vm71, %v62, 0
    %75 = vmatpush.bf16.msra.mxu0 0
    %76 = vmatpush.bf16.msra.mxu0 0
    %77 = vmatpush.bf16.msra.mxu0 0
    %78 = vmatpush.bf16.msra.mxu0 0
    %79 = vmatpush.bf16.msra.mxu0 0
    %80 = vmatpush.bf16.msra.mxu0 0
    %81 = vmatpush.bf16.msra.mxu0 0
    %82 = vmatpush.bf16.msra.mxu0 %v73
    %83 = vmatmul.bf16.gmra.mxu0 %v69
    %v84 = vpop.f32.mrf.mxu0
    %v85 = vadd.f32 %v65, %v84
    %v86 = vpop.f32.mrf.mxu0
    %v87 = vadd.f32 %v65, %v86
    %88 = vdwg.mxu0
    %v89 = vmax.f32 %v85, 0.0
    %v90 = vmax.f32 %v87, 0.0
    %v91 = vpack.c.bf16 %v90, %v89
    %v92 = vld [vmem:[#allocation2] sm:$0xf]
    %v93 = vld [vmem:[#allocation2 + $0x4] sm:$0xf]
    %v94 = vld [vmem:[#allocation2 + $0x8] sm:$0xf]
    %v95 = vld [vmem:[#allocation2 + $0xc] sm:$0xf]
    %v96 = vld [vmem:[#allocation2 + $0x10] sm:$0xf]
    %v97 = vld [vmem:[#allocation2 + $0x14] sm:$0xf]
    %v98 = vld [vmem:[#allocation2 + $0x18] sm:$0xf]
    %v99 = vld [vmem:[#allocation2 + $0x1c] sm:$0xf]
    %v100 = vld [vmem:[#allocation2 + $0x20] sm:$0xf]
    %v101 = vld [vmem:[#allocation2 + $0x24] sm:$0xf]
    %v102 = vld [vmem:[#allocation2 + $0x28] sm:$0xf]
    %v103 = vld [vmem:[#allocation2 + $0x2c] sm:$0xf]
    %v104 = vld [vmem:[#allocation2 + $0x30] sm:$0xf]
    %v105 = vld [vmem:[#allocation2 + $0x34] sm:$0xf]
    %v106 = vld [vmem:[#allocation2 + $0x38] sm:$0xf]
    %v107 = vld [vmem:[#allocation2 + $0x3c] sm:$0xf]
    %v108 = vld [vmem:[%s4] sm:$0x1]
    %v110 = vperm.slane %v108, 0
    %v128 = vunpack.c.l.b16 %v92
    %v129 = vunpack.c.l.b16 %v93
    %v130 = vunpack.c.l.b16 %v94
    %v131 = vunpack.c.l.b16 %v95
    %v132 = vunpack.c.l.b16 %v96
    %v133 = vunpack.c.l.b16 %v97
    %v134 = vunpack.c.l.b16 %v98
    %v135 = vunpack.c.l.b16 %v99
    %v136 = vunpack.c.l.b16 %v100
    %v137 = vunpack.c.l.b16 %v101
    %v138 = vunpack.c.l.b16 %v102
    %v139 = vunpack.c.l.b16 %v103
    %v140 = vunpack.c.l.b16 %v104
    %v141 = vunpack.c.l.b16 %v105
    %v142 = vunpack.c.l.b16 %v106
    %v143 = vunpack.c.l.b16 %v107
    %v144 = vpack.c.b16 %v129, %v128
    %v145 = vpack.c.b16 %v131, %v130
    %v146 = vpack.c.b16 %v133, %v132
    %v147 = vpack.c.b16 %v135, %v134
    %v148 = vpack.c.b16 %v137, %v136
    %v149 = vpack.c.b16 %v139, %v138
    %v150 = vpack.c.b16 %v141, %v140
    %v151 = vpack.c.b16 %v143, %v142
    %160 = vmatpush.bf16.msra.mxu0 %v151
    %161 = vmatpush.bf16.msra.mxu0 %v150
    %162 = vmatpush.bf16.msra.mxu0 %v149
    %163 = vmatpush.bf16.msra.mxu0 %v148
    %164 = vmatpush.bf16.msra.mxu0 %v147
    %165 = vmatpush.bf16.msra.mxu0 %v146
    %166 = vmatpush.bf16.msra.mxu0 %v145
    %167 = vmatpush.bf16.msra.mxu0 %v144
    %168 = vmatmul.bf16.gmra.mxu0 %v91
    %v169 = vpop.f32.mrf.mxu0
    %v170 = vadd.f32 %v110, %v169
    %v171 = vpop.f32.mrf.mxu0
    %v172 = vadd.f32 %v110, %v171
    %173 = vdwg.mxu0
    %v174 = vmax.f32 %v170, 0.0
    %v175 = vmax.f32 %v172, 0.0
    %v176 = vpack.c.bf16 %v175, %v174
    %v177 = vld [vmem:[#allocation4] sm:$0xf]
    %v178 = vld [vmem:[#allocation4 + $0x4] sm:$0xf]
    %v179 = vld [vmem:[#allocation4 + $0x8] sm:$0xf]
    %v180 = vld [vmem:[#allocation4 + $0xc] sm:$0xf]
    %v181 = vld [vmem:[#allocation4 + $0x10] sm:$0xf]
    %v182 = vld [vmem:[#allocation4 + $0x14] sm:$0xf]
    %v183 = vld [vmem:[#allocation4 + $0x18] sm:$0xf]
    %v184 = vld [vmem:[#allocation4 + $0x1c] sm:$0xf]
    %v185 = vld [vmem:[#allocation4 + $0x20] sm:$0xf]
    %v186 = vld [vmem:[#allocation4 + $0x24] sm:$0xf]
    %v187 = vld [vmem:[#allocation4 + $0x28] sm:$0xf]
    %v188 = vld [vmem:[#allocation4 + $0x2c] sm:$0xf]
    %v189 = vld [vmem:[#allocation4 + $0x30] sm:$0xf]
    %v190 = vld [vmem:[#allocation4 + $0x34] sm:$0xf]
    %v191 = vld [vmem:[#allocation4 + $0x38] sm:$0xf]
    %v192 = vld [vmem:[#allocation4 + $0x3c] sm:$0xf]
    %v193 = vld [vmem:[%s6] sm:$0x1]
    %v195 = vperm.slane %v193, 0
    %v213 = vunpack.c.l.b16 %v177
    %v214 = vunpack.c.l.b16 %v178
    %v215 = vunpack.c.l.b16 %v179
    %v216 = vunpack.c.l.b16 %v180
    %v217 = vunpack.c.l.b16 %v181
    %v218 = vunpack.c.l.b16 %v182
    %v219 = vunpack.c.l.b16 %v183
    %v220 = vunpack.c.l.b16 %v184
    %v221 = vunpack.c.l.b16 %v185
    %v222 = vunpack.c.l.b16 %v186
    %v223 = vunpack.c.l.b16 %v187
    %v224 = vunpack.c.l.b16 %v188
    %v225 = vunpack.c.l.b16 %v189
    %v226 = vunpack.c.l.b16 %v190
    %v227 = vunpack.c.l.b16 %v191
    %v228 = vunpack.c.l.b16 %v192
    %v229 = vpack.c.b16 %v214, %v213
    %v230 = vpack.c.b16 %v216, %v215
    %v231 = vpack.c.b16 %v218, %v217
    %v232 = vpack.c.b16 %v220, %v219
    %v233 = vpack.c.b16 %v222, %v221
    %v234 = vpack.c.b16 %v224, %v223
    %v235 = vpack.c.b16 %v226, %v225
    %v236 = vpack.c.b16 %v228, %v227
    %245 = vmatpush.bf16.msra.mxu0 %v236
    %246 = vmatpush.bf16.msra.mxu0 %v235
    %247 = vmatpush.bf16.msra.mxu0 %v234
    %248 = vmatpush.bf16.msra.mxu0 %v233
    %249 = vmatpush.bf16.msra.mxu0 %v232
    %250 = vmatpush.bf16.msra.mxu0 %v231
    %251 = vmatpush.bf16.msra.mxu0 %v230
    %252 = vmatpush.bf16.msra.mxu0 %v229
    %253 = vmatmul.bf16.gmra.mxu0 %v176
    %v254 = vpop.f32.mrf.mxu0
    %v255 = vadd.f32 %v195, %v254
    %v256 = vpop.f32.mrf.mxu0
    %v257 = vadd.f32 %v195, %v256
    %258 = vdwg.mxu0
    %vm259 = vcmask 31744
    %260 = vst.msk [vmem:[%s7] sm:$0xff] %vm259, %v255
    %261 = vst.msk [vmem:[%s7 + $0x8] sm:$0xff] %vm259, %v257
    // Predicated region
    $region38: #{_lambda_.1} parent=1 // pred_check
      _
    $region39: #{_lambda_.1} parent=1 // pred_check_branch
      %263 = sbr.rel (0) target = $region41
    $region40: #{_lambda_.1} parent=1 // pred_region
      _
    $region41: #{_lambda_.1} parent=1 // pred_fallthru
      _
    // Predicated region
    $region42: #{_lambda_.1} parent=1 // pred_check
      _
    $region43: #{_lambda_.1} parent=1 // pred_check_branch
      %265 = sbr.rel (0) target = $region45
    $region44: #{_lambda_.1} parent=1 // pred_region
      _
    $region45: #{_lambda_.1} parent=1 // pred_fallthru
      _
    %266 = vsyncpa [#allocation3], 1
    %267 = vsyncpa [#allocation5], 1

</llo_original>
